<compile_context>
chip_gen: v7x
topology: tpu7x:2x2x1
jax: 0.10.0
libtpu: 0.0.40
codegen_flags: <defaults>
</compile_context>

<pallas_src>
import functools

import jax
import jax.numpy as jnp
from jax.experimental import pallas as pl
from jax.experimental.pallas import tpu as pltpu


def _round_up(x, m):
    return ((x + m - 1) // m) * m


def _pick_batch_block(B, S, Kp, E, in_itemsize, out_itemsize, max_tb, vmem_budget):
    """Largest divisor of B that (a) fits the per-step VMEM budget
    (double-buffered input + output tiles) and (b) keeps >= 2 grid steps when
    possible so v7x's two TensorCores both get work."""
    def step_bytes(tb):
        return 2 * tb * S * (Kp * in_itemsize + E * out_itemsize)

    divisors = [d for d in range(1, B + 1) if B % d == 0]
    fitting = [d for d in divisors if d <= max_tb and step_bytes(d) <= vmem_budget]
    if not fitting:
        fitting = [1]
    multi_step = [d for d in fitting if B // d >= 2]
    return max(multi_step) if multi_step else max(fitting)


def _patch_embed_kernel(p_ref, w_ref, a_ref, o_ref, *, tb):
    """One grid step == `tb` whole images.

    p_ref: (tb, S, Kp)  patch pixels, row 0 of each image is all-zero "cls patch"
    w_ref: (Kp, E)      projection matrix (constant index_map -> resident)
    a_ref: (1, S, E)    f32 addend = [cls+pos_0 ; bias+pos_1..N] (resident)
    o_ref: (tb, S, E)   FINAL output tile, model dtype
    """
    w = w_ref[...]
    add = a_ref[0]                       # (S, E) f32
    for i in range(tb):                  # static unroll; tb is small (<= 8)
        acc = jnp.dot(p_ref[i], w, preferred_element_type=jnp.float32)
        o_ref[i] = (acc + add).astype(o_ref.dtype)


def patch_embedding_forward(
    x, conv_w, conv_b, cls_token, pos_embed, patch_size,
    *, compute_dtype=None, batch_block=8, allow_input_fusion=False,
    vmem_budget_bytes=24 * 2 ** 20,
):
    """x: (B, C, H, W) NCHW, conv_w: (E, C, P, P), conv_b: (E,),
    cls_token: (1, 1, E), pos_embed: (1, N+1, E).  Returns (B, N+1, E)."""
    B, C, H, W = x.shape
    E = conv_w.shape[0]
    P = patch_size
    nh, nw = H // P, W // P
    N = nh * nw
    S = N + 1                            # sequence length incl. cls token
    K = C * P * P
    Kp = _round_up(K, 128)               # lane-dense contraction

    if compute_dtype is None:
        # Perf default (review): native-rate MXU inputs, f32 accumulation.
        compute_dtype = jnp.bfloat16
    out_dtype = x.dtype

    # --- glue: extract non-overlapping patches (pure data movement) -------
    # (B, C, nh, P, nw, P) -> (B, nh, nw, C, P, P) -> (B, N, K)
    patches = x.reshape(B, C, nh, P, nw, P).transpose(0, 2, 4, 1, 3, 5)
    patches = patches.reshape(B, N, K)
    # Prepend one all-zero "cls patch" row per image and zero-pad K -> Kp.
    patches_seq = jnp.pad(patches, ((0, 0), (1, 0), (0, Kp - K)))
    patches_seq = patches_seq.astype(compute_dtype)
    # TODO(synk): with allow_input_fusion=True XLA may fuse this producer into
    # operand 0 so patches_seq is never materialised in HBM (largest remaining
    # HBM consumer); kept opt-in for lowering safety.

    # Conv weight as a projection matrix: (E, C, P, P) -> (K, E) -> (Kp, E)
    w_mat = jnp.pad(conv_w.reshape(E, K).T, ((0, Kp - K), (0, 0)))
    w_mat = w_mat.astype(compute_dtype)

    # Fused epilogue addend: row 0 = cls + pos_0, rows 1..N = bias + pos_i.
    addend = pos_embed.astype(jnp.float32) + jnp.concatenate(
        [cls_token.reshape(1, 1, E).astype(jnp.float32),
         jnp.broadcast_to(conv_b.astype(jnp.float32)[None, None, :], (1, N, E))],
        axis=1)                          # (1, S, E) f32, tiny

    tb = _pick_batch_block(
        B, S, Kp, E,
        jnp.dtype(compute_dtype).itemsize, jnp.dtype(out_dtype).itemsize,
        batch_block, vmem_budget_bytes)
    grid = (B // tb,)

    cparams = dict(dimension_semantics=("parallel",))
    if allow_input_fusion:
        cparams["allow_input_fusion"] = [True, False, False]

    out = pl.pallas_call(
        functools.partial(_patch_embed_kernel, tb=tb),
        out_shape=jax.ShapeDtypeStruct((B, S, E), out_dtype),
        grid=grid,
        in_specs=[
            # (tb, S, Kp): S and Kp equal the full array dims -> legal block.
            pl.BlockSpec((tb, S, Kp), lambda b: (b, 0, 0)),
            # Weight: constant block index -> fetched once, stays resident.
            # TODO(synk): pipeline_mode=pl.Buffered(1) would halve its VMEM
            # footprint; left at default buffering for lowering safety.
            pl.BlockSpec((Kp, E), lambda b: (0, 0)),
            # Addend: constant block index -> resident.
            pl.BlockSpec((1, S, E), lambda b: (0, 0, 0)),
        ],
        out_specs=pl.BlockSpec((tb, S, E), lambda b: (b, 0, 0)),
        compiler_params=pltpu.CompilerParams(**cparams),
    )(patches_seq, w_mat, addend)

    # nn.Dropout (eval) == identity.
    # TODO(synk): training-mode dropout (pltpu.prng_* mask + scale) not implemented.
    return out


def _reference(x, conv_w, conv_b, cls_token, pos_embed, patch_size):
    """Pure-JAX reference mirroring the PyTorch forward (eval mode)."""
    B, C, H, W = x.shape
    E = conv_w.shape[0]
    P = patch_size
    nh, nw = H // P, W // P
    N = nh * nw
    K = C * P * P
    patches = x.reshape(B, C, nh, P, nw, P).transpose(0, 2, 4, 1, 3, 5)
    patches = patches.reshape(B, N, K)
    proj = jnp.einsum("bnk,ek->bne", patches, conv_w.reshape(E, K),
                      precision=jax.lax.Precision.HIGHEST) + conv_b
    cls = jnp.broadcast_to(cls_token, (B, 1, E))
    return jnp.concatenate([cls, proj], axis=1) + pos_embed


if __name__ == "__main__":
    # Small shapes consistent with the module's forward:
    in_channels = 4
    patch_size = 8
    embed_dim = 32
    height = width = 16
    num_patches = (height // patch_size) * (width // patch_size)  # 4
    batch = 2

    key = jax.random.PRNGKey(0)
    k_x, k_w, k_b, k_cls, k_pos = jax.random.split(key, 5)

    x = jax.random.normal(k_x, (batch, in_channels, height, width), jnp.float32)
    conv_w = jax.random.normal(
        k_w, (embed_dim, in_channels, patch_size, patch_size), jnp.float32) * 0.02
    conv_b = jax.random.normal(k_b, (embed_dim,), jnp.float32) * 0.02
    cls_token = jax.random.normal(k_cls, (1, 1, embed_dim), jnp.float32)
    pos_embed = jax.random.normal(k_pos, (1, num_patches + 1, embed_dim), jnp.float32)

    ref = _reference(x, conv_w, conv_b, cls_token, pos_embed, patch_size)

    # Explicit f32 path (matches the PyTorch module's numerics).
    fwd_f32 = jax.jit(functools.partial(
        patch_embedding_forward, patch_size=patch_size, compute_dtype=jnp.float32))
    out_f32 = jax.block_until_ready(fwd_f32(x, conv_w, conv_b, cls_token, pos_embed))
    assert out_f32.shape == (batch, num_patches + 1, embed_dim), out_f32.shape
    assert out_f32.dtype == x.dtype
    assert jnp.allclose(out_f32, ref, atol=1e-3, rtol=1e-3), "f32 mismatch vs reference"

    # Default path: bf16 MXU inputs, f32 accumulation (perf default).
    fwd = jax.jit(functools.partial(patch_embedding_forward, patch_size=patch_size))
    out_def = jax.block_until_ready(fwd(x, conv_w, conv_b, cls_token, pos_embed))
    assert out_def.shape == (batch, num_patches + 1, embed_dim), out_def.shape
    assert jnp.allclose(out_def, ref, atol=3e-2, rtol=3e-2), "bf16 mismatch vs reference"

    print("KERNEL_OK")
</pallas_src>

<mosaic_0001>
module attributes {stable_mosaic.version = 11 : i64} {
  func.func @_patch_embed_kernel(%arg0: i32, %arg1: memref<1x5x256xf32, #tpu.memory_space<vmem>>, %arg2: memref<256x32xf32, #tpu.memory_space<vmem>>, %arg3: memref<1x5x32xf32, #tpu.memory_space<vmem>>, %arg4: memref<1x5x32xf32, #tpu.memory_space<vmem>>) attributes {dimension_semantics = [#tpu.dimension_semantics<parallel>], iteration_bounds = array<i64: 2>, scalar_prefetch = 0 : i64, scratch_operands = 0 : i64, tpu.core_type = #tpu.core_type<tc>, window_params = [{transform_indices = @transform_0, window_bounds = array<i64: 1, 5, 256>}, {pipeline_mode = #tpu.pipeline_mode<synchronous>, transform_indices = @transform_1, window_bounds = array<i64: 256, 32>}, {pipeline_mode = #tpu.pipeline_mode<synchronous>, transform_indices = @transform_2, window_bounds = array<i64: 1, 5, 32>}, {transform_indices = @transform_3, window_bounds = array<i64: 1, 5, 32>}]} {
    %c0 = arith.constant 0 : index
    %c0_0 = arith.constant 0 : index
    %0 = vector.load %arg2[%c0, %c0_0] : memref<256x32xf32, #tpu.memory_space<vmem>>, vector<256x32xf32>
    %c0_1 = arith.constant 0 : index
    %c0_2 = arith.constant 0 : index
    %c0_3 = arith.constant 0 : index
    %1 = vector.load %arg3[%c0_1, %c0_2, %c0_3] : memref<1x5x32xf32, #tpu.memory_space<vmem>>, vector<1x5x32xf32>
    %2 = vector.shape_cast %1 : vector<1x5x32xf32> to vector<5x32xf32>
    %c0_4 = arith.constant 0 : index
    %c0_5 = arith.constant 0 : index
    %c0_6 = arith.constant 0 : index
    %3 = vector.load %arg1[%c0_4, %c0_5, %c0_6] : memref<1x5x256xf32, #tpu.memory_space<vmem>>, vector<1x5x256xf32>
    %4 = vector.shape_cast %3 : vector<1x5x256xf32> to vector<5x256xf32>
    %cst = arith.constant dense<0.000000e+00> : vector<5x32xf32>
    %5 = tpu.matmul %4, %0, %cst {dimension_numbers = #tpu.dot_dimension_numbers<[1], [0], [0], [1], [0, 0, 1, 1], [], []>} : vector<5x256xf32>, vector<256x32xf32>, vector<5x32xf32> -> vector<5x32xf32>
    %6 = arith.addf %5, %2 : vector<5x32xf32>
    %c0_7 = arith.constant 0 : index
    %c0_8 = arith.constant 0 : index
    %c0_9 = arith.constant 0 : index
    %7 = vector.load %arg4[%c0_7, %c0_8, %c0_9] : memref<1x5x32xf32, #tpu.memory_space<vmem>>, vector<1x5x32xf32>
    %8 = vector.shape_cast %7 : vector<1x5x32xf32> to vector<5x32xf32>
    %9 = vector.shape_cast %6 : vector<5x32xf32> to vector<1x5x32xf32>
    tpu.vector_store %arg4[%c0_7, %c0_8, %c0_9], %9 {strides = array<i32>} : memref<1x5x32xf32, #tpu.memory_space<vmem>>, vector<1x5x32xf32>,
    return
  }
  func.func @transform_0(%arg0: i32) -> (i32, i32, i32) {
    %c0_i32 = arith.constant 0 : i32
    %c0_i32_0 = arith.constant 0 : i32
    %c0_i32_1 = arith.constant 0 : i32
    return %arg0, %c0_i32, %c0_i32_0 : i32, i32, i32
  }
  func.func @transform_1(%arg0: i32) -> (i32, i32) {
    %c0_i32 = arith.constant 0 : i32
    %c0_i32_0 = arith.constant 0 : i32
    %c0_i32_1 = arith.constant 0 : i32
    return %c0_i32, %c0_i32_0 : i32, i32
  }
  func.func @transform_2(%arg0: i32) -> (i32, i32, i32) {
    %c0_i32 = arith.constant 0 : i32
    %c0_i32_0 = arith.constant 0 : i32
    %c0_i32_1 = arith.constant 0 : i32
    %c0_i32_2 = arith.constant 0 : i32
    return %c0_i32, %c0_i32_0, %c0_i32_1 : i32, i32, i32
  }
  func.func @transform_3(%arg0: i32) -> (i32, i32, i32) {
    %c0_i32 = arith.constant 0 : i32
    %c0_i32_0 = arith.constant 0 : i32
    %c0_i32_1 = arith.constant 0 : i32
    return %arg0, %c0_i32, %c0_i32_0 : i32, i32, i32
  }
}

</mosaic_0001>

<llo_original>
// kernel: patch_embedding_forward.1
$region0: #{patch_embedding_forward.1}
  #allocation0 [shape = 'u32[]', space=smem, size = 0x4, offset = 0x4, fixed_abs, tag = 'smem constant byte address 0x4 - core index']
  #allocation1 [shape = 'u32[144,128]{1,0:T(1,128)}', space=vmem, size = 0x12000, scoped, tag = 'internal scratch']
  %s0 = inlined_call_operand.vmem [shape: f32[2,5,256], index: 0, kind: input, shape index: {}]
  %s1 = inlined_call_operand.vmem [shape: f32[256,32], index: 1, kind: input, shape index: {}]
  %s2 = inlined_call_operand.vmem [shape: f32[1,5,32], index: 2, kind: input, shape index: {}]
  %s3 = inlined_call_operand.vmem [shape: f32[2,5,32], index: 3, kind: output, shape index: {}]
  %s4 = sld [smem:[#allocation0]]
  $region45: #{patch_embedding_forward.1} parent=0
    _
  %s6 = ssub.s32 1, %s4
  %s7 = scalar_select 0, %s6, %s4
  loop: start=0, step=1, limit=4
  $region2: #{patch_embedding_forward.1} parent=0 // loop_pre_header
    _
  $region3: #{patch_embedding_forward.1} parent=0 // loop_header
    %s9 = sphi 0, %s13
    %p10 = scmp.ge.s32.totalorder %s9, 4
    %s19 = sphi 0, %s21
    %s22 = sphi 0, %s19
    %s23 = sphi 0, %s22
    %s39 = sphi 0, %s23
    %s43 = sphi 0, %s43
    %s45 = sphi 0, %s43
    %s46 = sphi 0, %s45
    %s60 = sphi 0, %s46
    %s64 = sphi 0, %s64
    %s66 = sphi 0, %s64
    %s67 = sphi 0, %s66
    %s81 = sphi 0, %s67
    %s87 = sphi 0, %s89
    %s90 = sphi 0, %s87
    %s91 = sphi 0, %s90
    %s107 = sphi 0, %s91
  $region4: #{patch_embedding_forward.1} parent=0 // loop_header_branch
    %12 = sbr.rel (%p10) target = $region8
  $region5: #{patch_embedding_forward.1} parent=0 // loop_body
    %s14 = ssub.s32 %s9, 1
    %s15 = ssub.s32 %s9, 2
    %s16 = sadd.s32 %s9, 1
    %s17 = ssub.s32 %s9, %s16
    %p18 = scmp.eq.s32.totalorder %s17, 0
    %s20 = sadd.s32 %s19, 1
    %s21 = scalar_select %p18, %s19, %s20
    %p24 = pneg %p18
    %p25 = scmp.eq.s32.totalorder %s9, 1
    %p26 = por %p24, %p25
    %p27 = scmp.ne.s32.totalorder %s19, %s22
    %p28 = scmp.eq.s32.totalorder %s9, 0
    %p29 = por %p27, %p28
    %p30 = scmp.ne.s32.totalorder %s19, %s22
    %p31 = scmp.eq.s32.totalorder %s14, 1
    %p32 = por %p30, %p31
    %p33 = scmp.ne.s32.totalorder %s22, %s23
    %p34 = scmp.eq.s32.totalorder %s14, 0
    %p35 = por %p33, %p34
    %p36 = scmp.ne.s32.totalorder %s22, %s23
    %p37 = scmp.eq.s32.totalorder %s15, 1
    %p38 = por %p36, %p37
    %p40 = scmp.ne.s32.totalorder %s23, %s39
    %p41 = scmp.eq.s32.totalorder %s15, 0
    %p42 = por %p40, %p41
    %s44 = sadd.s32 %s43, 1
    %p47 = scmp.eq.s32.totalorder %s9, 1
    %p48 = scmp.ne.s32.totalorder %s43, %s45
    %p49 = scmp.eq.s32.totalorder %s9, 0
    %p50 = por %p48, %p49
    %p51 = scmp.ne.s32.totalorder %s43, %s45
    %p52 = scmp.eq.s32.totalorder %s14, 1
    %p53 = por %p51, %p52
    %p54 = scmp.ne.s32.totalorder %s45, %s46
    %p55 = scmp.eq.s32.totalorder %s14, 0
    %p56 = por %p54, %p55
    %p57 = scmp.ne.s32.totalorder %s45, %s46
    %p58 = scmp.eq.s32.totalorder %s15, 1
    %p59 = por %p57, %p58
    %p61 = scmp.ne.s32.totalorder %s46, %s60
    %p62 = scmp.eq.s32.totalorder %s15, 0
    %p63 = por %p61, %p62
    %s65 = sadd.s32 %s64, 1
    %p68 = scmp.eq.s32.totalorder %s9, 1
    %p69 = scmp.ne.s32.totalorder %s64, %s66
    %p70 = scmp.eq.s32.totalorder %s9, 0
    %p71 = por %p69, %p70
    %p72 = scmp.ne.s32.totalorder %s64, %s66
    %p73 = scmp.eq.s32.totalorder %s14, 1
    %p74 = por %p72, %p73
    %p75 = scmp.ne.s32.totalorder %s66, %s67
    %p76 = scmp.eq.s32.totalorder %s14, 0
    %p77 = por %p75, %p76
    %p78 = scmp.ne.s32.totalorder %s66, %s67
    %p79 = scmp.eq.s32.totalorder %s15, 1
    %p80 = por %p78, %p79
    %p82 = scmp.ne.s32.totalorder %s67, %s81
    %p83 = scmp.eq.s32.totalorder %s15, 0
    %p84 = por %p82, %p83
    %s85 = ssub.s32 %s9, %s16
    %p86 = scmp.eq.s32.totalorder %s85, 0
    %s88 = sadd.s32 %s87, 1
    %s89 = scalar_select %p86, %s87, %s88
    %p92 = pneg %p86
    %p93 = scmp.eq.s32.totalorder %s9, 1
    %p94 = por %p92, %p93
    %p95 = scmp.ne.s32.totalorder %s87, %s90
    %p96 = scmp.eq.s32.totalorder %s9, 0
    %p97 = por %p95, %p96
    %p98 = scmp.ne.s32.totalorder %s87, %s90
    %p99 = scmp.eq.s32.totalorder %s14, 1
    %p100 = por %p98, %p99
    %p101 = scmp.ne.s32.totalorder %s90, %s91
    %p102 = scmp.eq.s32.totalorder %s14, 0
    %p103 = por %p101, %p102
    %p104 = scmp.ne.s32.totalorder %s90, %s91
    %p105 = scmp.eq.s32.totalorder %s15, 1
    %p106 = por %p104, %p105
    %p108 = scmp.ne.s32.totalorder %s91, %s107
    %p109 = scmp.eq.s32.totalorder %s15, 0
    %p110 = por %p108, %p109
    %p111 = scmp.le.s32.totalorder 1, %s9
    %p112 = scmp.lt.s32.totalorder %s9, 3
    %p113 = pnand %p111, %p112
    %p114 = pneg %p113
    // Predicated region
    $region9: #{patch_embedding_forward.1} parent=5 // pred_check
      _
    $region10: #{patch_embedding_forward.1} parent=5 // pred_check_branch
      %116 = sbr.rel (%p113) target = $region12
    $region11: #{patch_embedding_forward.1} parent=5 // pred_region
      %s117 = ssub.s32 %s9, 1
      // Predicated region
      $region13: #{patch_embedding_forward.1} parent=11 // pred_check
        %p118 = pneg %p56
      $region14: #{patch_embedding_forward.1} parent=11 // pred_check_branch
        %120 = sbr.rel (%p118) target = $region16
      $region15: #{patch_embedding_forward.1} parent=11 // pred_region
        _
      $region16: #{patch_embedding_forward.1} parent=11 // pred_fallthru
        _
      // Predicated region
      $region17: #{patch_embedding_forward.1} parent=11 // pred_check
        %p121 = pneg %p77
      $region18: #{patch_embedding_forward.1} parent=11 // pred_check_branch
        %123 = sbr.rel (%p121) target = $region20
      $region19: #{patch_embedding_forward.1} parent=11 // pred_region
        _
      $region20: #{patch_embedding_forward.1} parent=11 // pred_fallthru
        _
    $region12: #{patch_embedding_forward.1} parent=5 // pred_fallthru
      _
    %p124 = scmp.lt.s32.totalorder %s9, 2
    // Predicated region
    $region21: #{patch_embedding_forward.1} parent=5 // pred_check
      %p125 = pneg %p124
    $region22: #{patch_embedding_forward.1} parent=5 // pred_check_branch
      %127 = sbr.rel (%p125) target = $region24
    $region23: #{patch_embedding_forward.1} parent=5 // pred_region
      // Predicated region
      $region25: #{patch_embedding_forward.1} parent=23 // pred_check
        %p128 = pneg %p29
      $region26: #{patch_embedding_forward.1} parent=23 // pred_check_branch
        %130 = sbr.rel (%p128) target = $region28
      $region27: #{patch_embedding_forward.1} parent=23 // pred_region
        %p131 = scmp.lt.s32.totalorder %s9, 1
        %s132 = scalar_select %p131, %s9, 1
        %s133 = smul.addr %s132, 2
        %s134 = smul.addr %s133, 8
        %s135 = scalar_lea.vmem %s0, %s134
      $region28: #{patch_embedding_forward.1} parent=23 // pred_fallthru
        _
    $region24: #{patch_embedding_forward.1} parent=5 // pred_fallthru
      _
    %p136 = scmp.le.s32.totalorder 1, %s9
    %p137 = scmp.lt.s32.totalorder %s9, 3
    %p138 = pnand %p136, %p137
    %p139 = pneg %p138
    // Predicated region
    $region29: #{patch_embedding_forward.1} parent=5 // pred_check
      _
    $region30: #{patch_embedding_forward.1} parent=5 // pred_check_branch
      %141 = sbr.rel (%p138) target = $region32
    $region31: #{patch_embedding_forward.1} parent=5 // pred_region
      %s142 = ssub.s32 %s9, 1
      %p143 = scmp.lt.s32.totalorder %s14, 1
      %s144 = scalar_select %p143, %s14, 1
      %s145 = smul.addr %s144, 2
      %s146 = smul.addr %s145, 8
      %s147 = scalar_lea.vmem %s0, %s146
      %p148 = pneg %p35
      %p149 = pneg %p32
      %p150 = pneg %p56
      %p151 = pneg %p53
      %p152 = pneg %p77
      %p153 = pneg %p74
      %p154 = pneg %p103
      %p155 = pneg %p100
      %p156 = scmp.lt.s32.totalorder %s14, 1
      %s157 = scalar_select %p156, %s14, 1
      %s158 = smul.addr %s157, 8
      %s159 = scalar_lea.vmem %s3, %s158
      %p160 = scmp.lt.s32.totalorder %s14, 1
      %s161 = scalar_select %p160, %s14, 1
      %s162 = smul.addr %s161, 2
      %s163 = smul.addr %s162, 8
      %s164 = scalar_lea.vmem %s0, %s163
      %p165 = scmp.lt.s32.totalorder %s14, 1
      %s166 = scalar_select %p165, %s14, 1
      %s167 = smul.addr %s166, 8
      %s168 = scalar_lea.vmem %s3, %s167
      %v169 = vld [vmem:[%s1] sm:$0xff]
      %v170 = vld [vmem:[%s1 + $0x8] sm:$0xff]
      %v171 = vld [vmem:[%s1 + $0x10] sm:$0xff]
      %v172 = vld [vmem:[%s1 + $0x18] sm:$0xff]
      %v173 = vld [vmem:[%s1 + $0x20] sm:$0xff]
      %v174 = vld [vmem:[%s1 + $0x28] sm:$0xff]
      %v175 = vld [vmem:[%s1 + $0x30] sm:$0xff]
      %v176 = vld [vmem:[%s1 + $0x38] sm:$0xff]
      %v177 = vld [vmem:[%s1 + $0x40] sm:$0xff]
      %v178 = vld [vmem:[%s1 + $0x48] sm:$0xff]
      %v179 = vld [vmem:[%s1 + $0x50] sm:$0xff]
      %v180 = vld [vmem:[%s1 + $0x58] sm:$0xff]
      %v181 = vld [vmem:[%s1 + $0x60] sm:$0xff]
      %v182 = vld [vmem:[%s1 + $0x68] sm:$0xff]
      %v183 = vld [vmem:[%s1 + $0x70] sm:$0xff]
      %v184 = vld [vmem:[%s1 + $0x78] sm:$0xff]
      %v185 = vld [vmem:[%s1 + $0x80] sm:$0xff]
      %v186 = vld [vmem:[%s1 + $0x88] sm:$0xff]
      %v187 = vld [vmem:[%s1 + $0x90] sm:$0xff]
      %v188 = vld [vmem:[%s1 + $0x98] sm:$0xff]
      %v189 = vld [vmem:[%s1 + $0xa0] sm:$0xff]
      %v190 = vld [vmem:[%s1 + $0xa8] sm:$0xff]
      %v191 = vld [vmem:[%s1 + $0xb0] sm:$0xff]
      %v192 = vld [vmem:[%s1 + $0xb8] sm:$0xff]
      %v193 = vld [vmem:[%s1 + $0xc0] sm:$0xff]
      %v194 = vld [vmem:[%s1 + $0xc8] sm:$0xff]
      %v195 = vld [vmem:[%s1 + $0xd0] sm:$0xff]
      %v196 = vld [vmem:[%s1 + $0xd8] sm:$0xff]
      %v197 = vld [vmem:[%s1 + $0xe0] sm:$0xff]
      %v198 = vld [vmem:[%s1 + $0xe8] sm:$0xff]
      %v199 = vld [vmem:[%s1 + $0xf0] sm:$0xff]
      %v200 = vld [vmem:[%s1 + $0xf8] sm:$0xff]
      %v201 = vld [vmem:[%s2] sm:$0x1f]
      %v202 = vld [vmem:[%s164] sm:$0x1f]
      %v203 = vld [vmem:[%s164 + $0x8] sm:$0x1f]
      %204 = vmatprep.subr.mxu0 0.0
      %205 = vmatpush1.msra.mxu0 %v169
      %206 = vmatprep.subr.mxu0 0.0
      %207 = vmatpush1.msra.mxu0 %v170
      %208 = vmatprep.subr.mxu0 0.0
      %209 = vmatpush1.msra.mxu0 %v171
      %210 = vmatprep.subr.mxu0 0.0
      %211 = vmatpush1.msra.mxu0 %v172
      %212 = vmatprep.subr.mxu0 0.0
      %213 = vmatpush1.msra.mxu0 %v173
      %214 = vmatprep.subr.mxu0 0.0
      %215 = vmatpush1.msra.mxu0 %v174
      %216 = vmatprep.subr.mxu0 0.0
      %217 = vmatpush1.msra.mxu0 %v175
      %218 = vmatprep.subr.mxu0 0.0
      %219 = vmatpush1.msra.mxu0 %v176
      %220 = vmatprep.subr.mxu0 0.0
      %221 = vmatpush1.msra.mxu0 %v177
      %222 = vmatprep.subr.mxu0 0.0
      %223 = vmatpush1.msra.mxu0 %v178
      %224 = vmatprep.subr.mxu0 0.0
      %225 = vmatpush1.msra.mxu0 %v179
      %226 = vmatprep.subr.mxu0 0.0
      %227 = vmatpush1.msra.mxu0 %v180
      %228 = vmatprep.subr.mxu0 0.0
      %229 = vmatpush1.msra.mxu0 %v181
      %230 = vmatprep.subr.mxu0 0.0
      %231 = vmatpush1.msra.mxu0 %v182
      %232 = vmatprep.subr.mxu0 0.0
      %233 = vmatpush1.msra.mxu0 %v183
      %234 = vmatprep.subr.mxu0 0.0
      %235 = vmatpush1.msra.mxu0 %v184
      %236 = vmatprep.subr.mxu0 0.0
      %237 = vmatpush1.msra.mxu0 %v185
      %238 = vmatprep.subr.mxu0 0.0
      %239 = vmatpush1.msra.mxu0 %v186
      %240 = vmatprep.subr.mxu0 0.0
      %241 = vmatpush1.msra.mxu0 %v187
      %242 = vmatprep.subr.mxu0 0.0
      %243 = vmatpush1.msra.mxu0 %v188
      %244 = vmatprep.subr.mxu0 0.0
      %245 = vmatpush1.msra.mxu0 %v189
      %246 = vmatprep.subr.mxu0 0.0
      %247 = vmatpush1.msra.mxu0 %v190
      %248 = vmatprep.subr.mxu0 0.0
      %249 = vmatpush1.msra.mxu0 %v191
      %250 = vmatprep.subr.mxu0 0.0
      %251 = vmatpush1.msra.mxu0 %v192
      %252 = vmatprep.subr.mxu0 0.0
      %253 = vmatpush1.msra.mxu0 %v193
      %254 = vmatprep.subr.mxu0 0.0
      %255 = vmatpush1.msra.mxu0 %v194
      %256 = vmatprep.subr.mxu0 0.0
      %257 = vmatpush1.msra.mxu0 %v195
      %258 = vmatprep.subr.mxu0 0.0
      %259 = vmatpush1.msra.mxu0 %v196
      %260 = vmatprep.subr.mxu0 0.0
      %261 = vmatpush1.msra.mxu0 %v197
      %262 = vmatprep.subr.mxu0 0.0
      %263 = vmatpush1.msra.mxu0 %v198
      %264 = vmatprep.subr.mxu0 0.0
      %265 = vmatpush1.msra.mxu0 %v199
      %266 = vmatprep.subr.mxu0 0.0
      %267 = vmatpush1.msra.mxu0 %v200
      %268 = vmatprep.mubr.f32.mxu0 %v203
      %269 = vmatmul.mubr.f32.gmra.mrb[0].mxu0 %v202
      %v270 = vpop.f32.mrb[0].mxu0
      %v271 = vadd.f32 %v201, %v270
      %v272 = vpop.f32.mrb[0].mxu0
      %273 = vdwg.mxu0
      %vm274 = vcmask 258048
      %275 = vst.msk [vmem:[%s168] sm:$0x1f] %vm274, %v271
      %p276 = scmp.lt.s32.totalorder %s14, 1
      %s277 = scalar_select %p276, %s14, 1
      %s278 = smul.addr %s277, 8
      %s279 = scalar_lea.vmem %s3, %s278
      // Predicated region
      $region33: #{patch_embedding_forward.1} parent=31 // pred_check
        %p280 = pneg %p100
      $region34: #{patch_embedding_forward.1} parent=31 // pred_check_branch
        %282 = sbr.rel (%p280) target = $region36
      $region35: #{patch_embedding_forward.1} parent=31 // pred_region
        _
      $region36: #{patch_embedding_forward.1} parent=31 // pred_fallthru
        _
    $region32: #{patch_embedding_forward.1} parent=5 // pred_fallthru
      _
    %p283 = scmp.le.s32.totalorder 2, %s9
    // Predicated region
    $region37: #{patch_embedding_forward.1} parent=5 // pred_check
      %p284 = pneg %p283
    $region38: #{patch_embedding_forward.1} parent=5 // pred_check_branch
      %286 = sbr.rel (%p284) target = $region40
    $region39: #{patch_embedding_forward.1} parent=5 // pred_region
      %s287 = ssub.s32 %s9, 2
      // Predicated region
      $region41: #{patch_embedding_forward.1} parent=39 // pred_check
        %p288 = pneg %p106
      $region42: #{patch_embedding_forward.1} parent=39 // pred_check_branch
        %290 = sbr.rel (%p288) target = $region44
      $region43: #{patch_embedding_forward.1} parent=39 // pred_region
        %p291 = scmp.lt.s32.totalorder %s15, 1
        %s292 = scalar_select %p291, %s15, 1
        %s293 = smul.addr %s292, 8
        %s294 = scalar_lea.vmem %s3, %s293
      $region44: #{patch_embedding_forward.1} parent=39 // pred_fallthru
        _
    $region40: #{patch_embedding_forward.1} parent=5 // pred_fallthru
      _
  $region6: #{patch_embedding_forward.1} parent=0 // loop_footer
    %s13 = sadd.s32 1, %s9
  $region7: #{patch_embedding_forward.1} parent=0 // loop_footer_branch
    %8 = sbr.rel target = $region3
  $region8: #{patch_embedding_forward.1} parent=0 // loop_exit
    _

</llo_original>
